<compile_context>
chip_gen: v7x
topology: tpu7x:2x2x1
jax: 0.10.0
libtpu: 0.0.40
codegen_flags: <defaults>
</compile_context>

<pallas_src>
import functools

import jax
import jax.numpy as jnp
from jax.experimental import pallas as pl
from jax.experimental.pallas import tpu as pltpu

_BN_EPS = 1e-5
_LANE = 128
_STATS_ROWS = 8     # sublane-aligned rows for the per-tile (sum, sumsq) block


def _round_up(x, m):
    return (x + m - 1) // m * m


@functools.lru_cache(maxsize=None)
def _vmem_limit_bytes():
    # Per-chip VMEM budget: stay <= half capacity (32 MiB on v7x, 64 MiB on v5e/v6e).
    try:
        cap = int(pltpu.get_tpu_info().vmem_capacity_bytes)
    except Exception:
        cap = 64 * 1024 * 1024
    return int(min(max(cap // 2, 16 * 1024 * 1024), 64 * 1024 * 1024))


def _compiler_params(dimension_semantics):
    return pltpu.CompilerParams(
        dimension_semantics=dimension_semantics,
        vmem_limit_bytes=_vmem_limit_bytes(),
    )


def _choose_row_tile(m, cap=1024):
    """Row tile: whole M when small (no padding copy), else a multiple-of-8
    divisor of M; pad M only as a last resort (zero rows keep BN stats exact)."""
    if m <= cap:
        return m, m
    t = cap - cap % 8
    while t >= 8:
        if m % t == 0:
            return t, m
        t -= 8
    mp = _round_up(m, 8)
    tm = min(cap - cap % 8, mp)
    return tm, _round_up(mp, tm)


def _plan_tap_tiles(n, ho, wo, row_cap=2048):
    """(images per step, output rows per step) for the in-kernel-tap conv.
    Multi-block plans keep each block's row count a multiple of 8; tiny
    spatial layers take the whole batch in one full-array block."""
    rows_img = ho * wo
    if rows_img % 8 == 0:
        if rows_img <= row_cap:
            return 1, ho
        for bh in range(ho, 0, -1):
            if ho % bh == 0 and (bh * wo) % 8 == 0 and bh * wo <= row_cap:
                return 1, bh
        return 1, ho
    return n, ho


# ---------------------------------------------------------------------------
# Pallas kernels
# ---------------------------------------------------------------------------
def _conv3x3s1_kernel(x_hbm, w_ref, y_ref, stats_ref, slab_ref, sem,
                      *, g, bh, nbh, wo, rows_blk):
    """Pass 1 (stride-1 3x3 conv, no im2col): DMA a (g, bh+2, Wp, Cin) input row
    slab, accumulate the 9 shifted-tap matmuls in f32, write bf16 output plus
    this tile's BN partial (sum, sumsq)."""
    m = pl.program_id(0)
    n0 = (m // nbh) * g
    r0 = (m % nbh) * bh
    copy = pltpu.make_async_copy(
        x_hbm.at[pl.ds(n0, g), pl.ds(r0, bh + 2)], slab_ref, sem)
    copy.start()
    copy.wait()

    xv = slab_ref[...]                        # (g, bh+2, Wp, Cin_p) bf16
    cin = xv.shape[-1]
    coutp = w_ref.shape[-1]

    if wo % 8 == 0:
        # Fast path: one (g*bh*wo, Cin) x (Cin, Cout) matmul per tap.
        acc = jnp.zeros((rows_blk, coutp), jnp.float32)
        for ky in range(3):
            for kx in range(3):
                lhs = xv[:, ky:ky + bh, kx:kx + wo, :].reshape(rows_blk, cin)
                acc = acc + jnp.dot(lhs, w_ref[ky, kx],
                                    preferred_element_type=jnp.float32)
        y_ref[...] = acc.astype(y_ref.dtype)
        s1 = jnp.sum(acc, axis=0, keepdims=True)
        s2 = jnp.sum(acc * acc, axis=0, keepdims=True)
    else:
        # Tiny-spatial path (wo < 8): per-output-row matmuls avoid layout-
        # changing reshapes; these layers are negligible in FLOPs and bytes.
        s1 = jnp.zeros((1, coutp), jnp.float32)
        s2 = jnp.zeros((1, coutp), jnp.float32)
        for gi in range(g):
            for oy in range(bh):
                acc = jnp.zeros((wo, coutp), jnp.float32)
                for ky in range(3):
                    row = xv[gi, oy + ky]              # (Wp, Cin_p)
                    for kx in range(3):
                        acc = acc + jnp.dot(row[kx:kx + wo, :], w_ref[ky, kx],
                                            preferred_element_type=jnp.float32)
                r = (gi * bh + oy) * wo
                y_ref[r:r + wo, :] = acc.astype(y_ref.dtype)
                s1 = s1 + jnp.sum(acc, axis=0, keepdims=True)
                s2 = s2 + jnp.sum(acc * acc, axis=0, keepdims=True)

    stats_ref[0] = jnp.concatenate(
        [s1, s2, jnp.zeros((_STATS_ROWS - 2, coutp), jnp.float32)], axis=0)


def _conv_im2col_kernel(a_ref, w_ref, y_ref, stats_ref):
    """Pass 1 fallback (stride>1 / 7x7): whole-K matmul of pre-built patches,
    bf16 output + per-tile BN partial stats from the f32 product."""
    y = jnp.dot(a_ref[...], w_ref[...], preferred_element_type=jnp.float32)
    y_ref[...] = y.astype(y_ref.dtype)
    s1 = jnp.sum(y, axis=0, keepdims=True)
    s2 = jnp.sum(y * y, axis=0, keepdims=True)
    stats_ref[0] = jnp.concatenate(
        [s1, s2, jnp.zeros((_STATS_ROWS - 2, y.shape[1]), jnp.float32)], axis=0)


def _bn_prep_kernel(stats_ref, gamma_ref, beta_ref, scale_ref, shift_ref,
                    *, inv_m, eps):
    """Reduce per-tile partial (sum, sumsq) and emit per-channel scale/shift."""
    s = jnp.sum(stats_ref[...], axis=0)            # (_STATS_ROWS, C) f32
    mean = s[0:1, :] * inv_m
    var = jnp.maximum(s[1:2, :] * inv_m - mean * mean, 0.0)   # biased variance
    scale = gamma_ref[...] * jax.lax.rsqrt(var + eps)
    scale_ref[...] = scale
    shift_ref[...] = beta_ref[...] - mean * scale


def _bn_apply_kernel(*refs, relu, has_res):
    """Pass 2: y (bf16) -> scale*y + shift [+ residual] [+ ReLU] -> bf16."""
    if has_res:
        y_ref, scale_ref, shift_ref, res_ref, o_ref = refs
    else:
        y_ref, scale_ref, shift_ref, o_ref = refs
        res_ref = None
    out = y_ref[...].astype(jnp.float32) * scale_ref[...] + shift_ref[...]
    if has_res:
        out = out + res_ref[...].astype(jnp.float32)
    if relu:
        out = jnp.maximum(out, 0.0)
    o_ref[...] = out.astype(o_ref.dtype)


def _maxpool_kernel(x_hbm, o_ref, slab_ref, sem, *, g, bh, nbh, wo, c):
    """3x3/s2/p1 max pool. Input is the padded activation viewed as
    (N, Hp, Wp/2, 2C) so the stride-2 column taps are aligned lane slices;
    row taps are plain major-dim indices of the DMA'd slab."""
    m = pl.program_id(0)
    n0 = (m // nbh) * g
    r0 = (m % nbh) * bh
    copy = pltpu.make_async_copy(
        x_hbm.at[pl.ds(n0, g), pl.ds(2 * r0, 2 * bh + 1)], slab_ref, sem)
    copy.start()
    copy.wait()
    xv = slab_ref[...]                              # (g, 2bh+1, Wm, 2C)
    for j in range(bh):
        best = None
        for dy in range(3):
            row = xv[:, 2 * j + dy]                 # (g, Wm, 2C)
            for half, off in ((0, 0), (1, 0), (0, 1)):
                v = row[:, off:off + wo, half * c:(half + 1) * c]
                best = v if best is None else jnp.maximum(best, v)
        o_ref[:, j] = best


def _avgpool_fc_kernel(x_ref, w_ref, b_ref, o_ref):
    """Global average pool over H*W + linear layer (classes padded to 128)."""
    pooled = jnp.mean(x_ref[...].astype(jnp.float32), axis=1)
    o_ref[...] = (jnp.dot(pooled, w_ref[...], preferred_element_type=jnp.float32)
                  + b_ref[...])


# ---------------------------------------------------------------------------
# JAX glue: im2col patch extraction (fallback path only).
# ---------------------------------------------------------------------------
def _im2col(x, kh, kw, stride, pad):
    n, h, w, c = x.shape
    ho = (h + 2 * pad - kh) // stride + 1
    wo = (w + 2 * pad - kw) // stride + 1
    if pad:
        x = jnp.pad(x, ((0, 0), (pad, pad), (pad, pad), (0, 0)))
    taps = []
    for ky in range(kh):
        for kx in range(kw):
            taps.append(jax.lax.slice(
                x, (0, ky, kx, 0),
                (n, ky + stride * (ho - 1) + 1, kx + stride * (wo - 1) + 1, c),
                (1, stride, stride, 1)))
    if len(taps) == 1:
        patches = taps[0].reshape(n * ho * wo, c)
    else:
        patches = jnp.stack(taps, axis=3).reshape(n * ho * wo, kh * kw * c)
    return patches, ho, wo


# ---------------------------------------------------------------------------
# Layer wrappers
# ---------------------------------------------------------------------------
def _conv3x3_taps(x, w, cout_p, g, bh):
    """Stride-1 3x3 conv, in-kernel tap accumulation (no im2col patches)."""
    n, h, wdt, cp = x.shape
    cout, cin_real = w.shape[0], w.shape[1]
    ho, wo = h, wdt
    nbh = ho // bh
    steps = (n // g) * nbh
    rows_blk = g * bh * wo

    wt = jnp.transpose(w, (2, 3, 1, 0))                      # (3,3,cin,cout)
    wt = jnp.pad(wt, ((0, 0), (0, 0), (0, cp - cin_real), (0, cout_p - cout)))
    wt = wt.astype(jnp.bfloat16)
    xp = jnp.pad(x, ((0, 0), (1, 1), (1, 1), (0, 0)))        # zero spatial halo

    y, stats = pl.pallas_call(
        functools.partial(_conv3x3s1_kernel, g=g, bh=bh, nbh=nbh, wo=wo,
                          rows_blk=rows_blk),
        grid=(steps,),
        in_specs=[pl.BlockSpec(memory_space=pl.ANY),
                  pl.BlockSpec((3, 3, cp, cout_p), lambda m: (0, 0, 0, 0))],
        out_specs=(pl.BlockSpec((rows_blk, cout_p), lambda m: (m, 0)),
                   pl.BlockSpec((1, _STATS_ROWS, cout_p), lambda m: (m, 0, 0))),
        out_shape=(jax.ShapeDtypeStruct((n * ho * wo, cout_p), jnp.bfloat16),
                   jax.ShapeDtypeStruct((steps, _STATS_ROWS, cout_p), jnp.float32)),
        scratch_shapes=[pltpu.VMEM((g, bh + 2, wdt + 2, cp), jnp.bfloat16),
                        pltpu.SemaphoreType.DMA],
        compiler_params=_compiler_params(("parallel",)),
    )(xp, wt)
    return y, stats, ho, wo


def _conv_im2col_pass(x, w, cout_p, stride, pad):
    """Fallback conv (7x7 / stride-2 / 1x1-downsample): whole-K tiled matmul."""
    n = x.shape[0]
    cin_p = x.shape[3]
    cout, cin_real, kh, kw = w.shape
    patches, ho, wo = _im2col(x, kh, kw, stride, pad)
    m_real = n * ho * wo
    k_real = kh * kw * cin_p
    kp = _round_up(k_real, _LANE)

    wt = jnp.transpose(w, (2, 3, 1, 0))
    wt = jnp.pad(wt, ((0, 0), (0, 0), (0, cin_p - cin_real), (0, cout_p - cout)))
    wt = wt.reshape(k_real, cout_p)
    if kp != k_real:
        wt = jnp.pad(wt, ((0, kp - k_real), (0, 0)))
        patches = jnp.pad(patches, ((0, 0), (0, kp - k_real)))
    wt = wt.astype(jnp.bfloat16)

    tm, mp = _choose_row_tile(m_real, cap=1024)
    if mp != m_real:
        # Zero-padded rows stay exactly zero through the matmul, so the BN
        # partial sums are unaffected (documented invariant).
        patches = jnp.pad(patches, ((0, mp - m_real), (0, 0)))
    steps = mp // tm

    y, stats = pl.pallas_call(
        _conv_im2col_kernel,
        grid=(steps,),
        in_specs=[pl.BlockSpec((tm, kp), lambda i: (i, 0)),
                  pl.BlockSpec((kp, cout_p), lambda i: (0, 0))],
        out_specs=(pl.BlockSpec((tm, cout_p), lambda i: (i, 0)),
                   pl.BlockSpec((1, _STATS_ROWS, cout_p), lambda i: (i, 0, 0))),
        out_shape=(jax.ShapeDtypeStruct((mp, cout_p), jnp.bfloat16),
                   jax.ShapeDtypeStruct((steps, _STATS_ROWS, cout_p), jnp.float32)),
        compiler_params=_compiler_params(("parallel",)),
    )(patches, wt)
    if mp != m_real:
        y = y[:m_real]
    return y, stats, ho, wo


def _bn_prep(stats, gamma, beta, m_real, cout_p):
    cout = gamma.shape[0]
    g2 = jnp.pad(gamma.reshape(1, -1).astype(jnp.float32),
                 ((0, 0), (0, cout_p - cout)))
    b2 = jnp.pad(beta.reshape(1, -1).astype(jnp.float32),
                 ((0, 0), (0, cout_p - cout)))
    s = stats.shape[0]
    scale, shift = pl.pallas_call(
        functools.partial(_bn_prep_kernel, inv_m=1.0 / float(m_real), eps=_BN_EPS),
        grid=(1,),
        in_specs=[pl.BlockSpec((s, _STATS_ROWS, cout_p), lambda i: (0, 0, 0)),
                  pl.BlockSpec((1, cout_p), lambda i: (0, 0)),
                  pl.BlockSpec((1, cout_p), lambda i: (0, 0))],
        out_specs=(pl.BlockSpec((1, cout_p), lambda i: (0, 0)),
                   pl.BlockSpec((1, cout_p), lambda i: (0, 0))),
        out_shape=(jax.ShapeDtypeStruct((1, cout_p), jnp.float32),
                   jax.ShapeDtypeStruct((1, cout_p), jnp.float32)),
        compiler_params=_compiler_params(("arbitrary",)),
    )(stats, g2, b2)
    return scale, shift


def _bn_apply(y2d, scale, shift, res2d, relu):
    m, cout_p = y2d.shape
    tm, mp = _choose_row_tile(m, cap=2048)
    has_res = res2d is not None
    if mp != m:
        y2d = jnp.pad(y2d, ((0, mp - m), (0, 0)))
        if has_res:
            res2d = jnp.pad(res2d, ((0, mp - m), (0, 0)))
    ins = [y2d, scale, shift]
    in_specs = [pl.BlockSpec((tm, cout_p), lambda i: (i, 0)),
                pl.BlockSpec((1, cout_p), lambda i: (0, 0)),
                pl.BlockSpec((1, cout_p), lambda i: (0, 0))]
    if has_res:
        ins.append(res2d)
        in_specs.append(pl.BlockSpec((tm, cout_p), lambda i: (i, 0)))
    out = pl.pallas_call(
        functools.partial(_bn_apply_kernel, relu=relu, has_res=has_res),
        grid=(mp // tm,),
        in_specs=in_specs,
        out_specs=pl.BlockSpec((tm, cout_p), lambda i: (i, 0)),
        out_shape=jax.ShapeDtypeStruct((mp, cout_p), jnp.bfloat16),
        compiler_params=_compiler_params(("parallel",)),
    )(*ins)
    return out[:m] if mp != m else out


def conv_bn_act(x, w, gamma, beta, *, stride, pad, relu, residual=None):
    """Conv (NHWC, channel-padded) + training-mode BN [+ residual] [+ ReLU]."""
    n = x.shape[0]
    cout, _, kh, kw = w.shape
    cout_p = _round_up(cout, _LANE)
    cin_p = x.shape[3]

    use_tap = (stride == 1 and kh == 3 and kw == 3 and pad == 1
               and cin_p % _LANE == 0)
    if use_tap:
        g, bh = _plan_tap_tiles(n, x.shape[1], x.shape[2])
        if g * bh * x.shape[2] > 4096:        # block too large for one step
            use_tap = False
    if use_tap:
        y2d, stats, ho, wo = _conv3x3_taps(x, w, cout_p, g, bh)
    else:
        y2d, stats, ho, wo = _conv_im2col_pass(x, w, cout_p, stride, pad)

    m_real = n * ho * wo
    scale, shift = _bn_prep(stats, gamma, beta, m_real, cout_p)
    res2d = residual.reshape(m_real, cout_p) if residual is not None else None
    out2d = _bn_apply(y2d, scale, shift, res2d, relu)
    return out2d.reshape(n, ho, wo, cout_p)


def maxpool_3x3_s2_p1(x):
    n, h, w, c = x.shape
    assert w % 2 == 0 and c % _LANE == 0
    ho = (h + 2 - 3) // 2 + 1
    wo = (w + 2 - 3) // 2 + 1
    # Zero padding is equivalent to -inf padding here: the input is post-ReLU
    # (>= 0) and every pooling window contains at least one real element.
    xp = jnp.pad(x, ((0, 0), (1, 1), (1, 1), (0, 0)))
    wm = (w + 2) // 2
    xpm = xp.reshape(n, h + 2, wm, 2 * c)     # free row-major view
    g, bh = 1, ho
    nbh = ho // bh
    steps = (n // g) * nbh
    return pl.pallas_call(
        functools.partial(_maxpool_kernel, g=g, bh=bh, nbh=nbh, wo=wo, c=c),
        grid=(steps,),
        in_specs=[pl.BlockSpec(memory_space=pl.ANY)],
        out_specs=pl.BlockSpec((g, bh, wo, c),
                               lambda m: (m // nbh, m % nbh, 0, 0)),
        out_shape=jax.ShapeDtypeStruct((n, ho, wo, c), x.dtype),
        scratch_shapes=[pltpu.VMEM((g, 2 * bh + 1, wm, 2 * c), x.dtype),
                        pltpu.SemaphoreType.DMA],
        compiler_params=_compiler_params(("parallel",)),
    )(xpm)


def avgpool_fc(x, w, b):
    n, h, ww, c = x.shape
    num_classes = w.shape[1]
    ncp = _round_up(num_classes, _LANE)
    wp = jnp.pad(w.astype(jnp.float32),
                 ((0, c - w.shape[0]), (0, ncp - num_classes)))
    bp = jnp.pad(b.reshape(1, -1).astype(jnp.float32),
                 ((0, 0), (0, ncp - num_classes)))
    x3 = x.reshape(n, h * ww, c)
    out = pl.pallas_call(
        _avgpool_fc_kernel,
        grid=(1,),
        in_specs=[pl.BlockSpec((n, h * ww, c), lambda i: (0, 0, 0)),
                  pl.BlockSpec((c, ncp), lambda i: (0, 0)),
                  pl.BlockSpec((1, ncp), lambda i: (0, 0))],
        out_specs=pl.BlockSpec((n, ncp), lambda i: (0, 0)),
        out_shape=jax.ShapeDtypeStruct((n, ncp), jnp.float32),
        compiler_params=_compiler_params(("arbitrary",)),
    )(x3, wp, bp)
    return out[:, :num_classes]


def basic_block(x, p):
    stride = p["stride"]
    out = conv_bn_act(x, p["conv1_w"], p["bn1_g"], p["bn1_b"],
                      stride=stride, pad=1, relu=True)
    if "down_w" in p:
        identity = conv_bn_act(x, p["down_w"], p["down_g"], p["down_b"],
                               stride=stride, pad=0, relu=False)
    else:
        identity = x
    # conv2 + BN + residual add + ReLU fused into the epilogue kernel.
    return conv_bn_act(out, p["conv2_w"], p["bn2_g"], p["bn2_b"],
                       stride=1, pad=1, relu=True, residual=identity)


def resnet_forward(params, x_nchw):
    x = jnp.transpose(x_nchw, (0, 2, 3, 1)).astype(jnp.bfloat16)  # NCHW -> NHWC
    x = conv_bn_act(x, params["conv1_w"], params["bn1_g"], params["bn1_b"],
                    stride=2, pad=3, relu=True)
    x = maxpool_3x3_s2_p1(x)
    for layer in params["layers"]:
        for blk in layer:
            x = basic_block(x, blk)
    return avgpool_fc(x, params["fc_w"], params["fc_b"])


# ---------------------------------------------------------------------------
# Deterministic parameter construction (BasicBlock, expansion = 1).
# ---------------------------------------------------------------------------
def init_params(key, layers=(1, 1, 1, 1), num_classes=10):
    keys = iter(jax.random.split(key, 128))

    def conv_w(cin, cout, k):
        fan_in = cin * k * k
        return (jax.random.normal(next(keys), (cout, cin, k, k), jnp.float32)
                * (2.0 / fan_in) ** 0.5)

    def bn(c):
        return jnp.ones((c,), jnp.float32), jnp.zeros((c,), jnp.float32)

    params = {"conv1_w": conv_w(3, 64, 7)}
    params["bn1_g"], params["bn1_b"] = bn(64)

    in_ch = 64
    all_layers = []
    for out_ch, nblocks, stride0 in zip((64, 128, 256, 512), layers, (1, 2, 2, 2)):
        blocks = []
        for bi in range(nblocks):
            stride = stride0 if bi == 0 else 1
            p = {"stride": stride, "conv1_w": conv_w(in_ch, out_ch, 3)}
            p["bn1_g"], p["bn1_b"] = bn(out_ch)
            p["conv2_w"] = conv_w(out_ch, out_ch, 3)
            p["bn2_g"], p["bn2_b"] = bn(out_ch)
            if stride != 1 or in_ch != out_ch:
                p["down_w"] = conv_w(in_ch, out_ch, 1)
                p["down_g"], p["down_b"] = bn(out_ch)
            in_ch = out_ch
            blocks.append(p)
        all_layers.append(blocks)
    params["layers"] = all_layers

    params["fc_w"] = (jax.random.normal(next(keys), (512, num_classes), jnp.float32)
                      * (1.0 / 512.0) ** 0.5)
    params["fc_b"] = jnp.zeros((num_classes,), jnp.float32)
    return params


if __name__ == "__main__":
    key = jax.random.PRNGKey(0)
    k_param, k_input = jax.random.split(key)
    # Small ResNet (layers = [1,1,1,1], BasicBlock), num_classes = 10.
    params = init_params(k_param, layers=(1, 1, 1, 1), num_classes=10)
    x = jax.random.normal(k_input, (2, 3, 32, 32), jnp.float32)  # NCHW like PyTorch

    logits = resnet_forward(params, x)
    logits = jax.block_until_ready(logits)
    assert logits.shape == (2, 10) and logits.dtype == jnp.float32
    assert bool(jnp.all(jnp.isfinite(logits)))
    print("KERNEL_OK")
</pallas_src>

<mosaic_0001>
module attributes {stable_mosaic.version = 11 : i64} {
  func.func @_conv_im2col_kernel(%arg0: i32, %arg1: memref<512x256xbf16, #tpu.memory_space<vmem>>, %arg2: memref<256x128xbf16, #tpu.memory_space<vmem>>, %arg3: memref<512x128xbf16, #tpu.memory_space<vmem>>, %arg4: memref<1x8x128xf32, #tpu.memory_space<vmem>>) attributes {dimension_semantics = [#tpu.dimension_semantics<parallel>], iteration_bounds = array<i64: 1>, scalar_prefetch = 0 : i64, scratch_operands = 0 : i64, tpu.core_type = #tpu.core_type<tc>, window_params = [{transform_indices = @transform_0, window_bounds = array<i64: 512, 256>}, {pipeline_mode = #tpu.pipeline_mode<synchronous>, transform_indices = @transform_1, window_bounds = array<i64: 256, 128>}, {transform_indices = @transform_2, window_bounds = array<i64: 512, 128>}, {transform_indices = @transform_3, window_bounds = array<i64: 1, 8, 128>}]} {
    %c0 = arith.constant 0 : index
    %c0_0 = arith.constant 0 : index
    %0 = vector.load %arg1[%c0, %c0_0] : memref<512x256xbf16, #tpu.memory_space<vmem>>, vector<512x256xbf16>
    %c0_1 = arith.constant 0 : index
    %c0_2 = arith.constant 0 : index
    %1 = vector.load %arg2[%c0_1, %c0_2] : memref<256x128xbf16, #tpu.memory_space<vmem>>, vector<256x128xbf16>
    %cst = arith.constant dense<0.000000e+00> : vector<512x128xf32>
    %2 = tpu.matmul %0, %1, %cst {dimension_numbers = #tpu.dot_dimension_numbers<[1], [0], [0], [1], [0, 0, 1, 1], [], []>} : vector<512x256xbf16>, vector<256x128xbf16>, vector<512x128xf32> -> vector<512x128xf32>
    %3 = arith.truncf %2 : vector<512x128xf32> to vector<512x128xbf16>
    %c0_3 = arith.constant 0 : index
    %c0_4 = arith.constant 0 : index
    %4 = vector.load %arg3[%c0_3, %c0_4] : memref<512x128xbf16, #tpu.memory_space<vmem>>, vector<512x128xbf16>
    tpu.vector_store %arg3[%c0_3, %c0_4], %3 {strides = array<i32>} : memref<512x128xbf16, #tpu.memory_space<vmem>>, vector<512x128xbf16>,
    %cst_5 = arith.constant dense<0.000000e+00> : vector<128xf32>
    %5 = vector.multi_reduction <add>, %2, %cst_5 [0] : vector<512x128xf32> to vector<128xf32>
    %6 = vector.shape_cast %5 : vector<128xf32> to vector<1x128xf32>
    %7 = arith.mulf %2, %2 : vector<512x128xf32>
    %cst_6 = arith.constant dense<0.000000e+00> : vector<128xf32>
    %8 = vector.multi_reduction <add>, %7, %cst_6 [0] : vector<512x128xf32> to vector<128xf32>
    %9 = vector.shape_cast %8 : vector<128xf32> to vector<1x128xf32>
    %cst_7 = arith.constant 0.000000e+00 : f32
    %10 = vector.broadcast %cst_7 : f32 to vector<6x128xf32>
    %11 = tpu.concatenate %6, %9, %10 in 0 : vector<1x128xf32>, vector<1x128xf32>, vector<6x128xf32> -> vector<8x128xf32>
    %c0_8 = arith.constant 0 : index
    %c0_9 = arith.constant 0 : index
    %c0_10 = arith.constant 0 : index
    %12 = vector.load %arg4[%c0_8, %c0_9, %c0_10] : memref<1x8x128xf32, #tpu.memory_space<vmem>>, vector<1x8x128xf32>
    %13 = vector.shape_cast %12 : vector<1x8x128xf32> to vector<8x128xf32>
    %14 = vector.shape_cast %11 : vector<8x128xf32> to vector<1x8x128xf32>
    tpu.vector_store %arg4[%c0_8, %c0_9, %c0_10], %14 {strides = array<i32>} : memref<1x8x128xf32, #tpu.memory_space<vmem>>, vector<1x8x128xf32>,
    return
  }
  func.func @transform_0(%arg0: i32) -> (i32, i32) {
    %c0_i32 = arith.constant 0 : i32
    %c0_i32_0 = arith.constant 0 : i32
    return %arg0, %c0_i32 : i32, i32
  }
  func.func @transform_1(%arg0: i32) -> (i32, i32) {
    %c0_i32 = arith.constant 0 : i32
    %c0_i32_0 = arith.constant 0 : i32
    %c0_i32_1 = arith.constant 0 : i32
    return %c0_i32, %c0_i32_0 : i32, i32
  }
  func.func @transform_2(%arg0: i32) -> (i32, i32) {
    %c0_i32 = arith.constant 0 : i32
    %c0_i32_0 = arith.constant 0 : i32
    return %arg0, %c0_i32 : i32, i32
  }
  func.func @transform_3(%arg0: i32) -> (i32, i32, i32) {
    %c0_i32 = arith.constant 0 : i32
    %c0_i32_0 = arith.constant 0 : i32
    %c0_i32_1 = arith.constant 0 : i32
    return %arg0, %c0_i32, %c0_i32_0 : i32, i32, i32
  }
}

</mosaic_0001>

<llo_original>
// kernel: tpu_custom_call.1
$region0: #{tpu_custom_call.1}
  #allocation0 [shape = 'u32[]', space=smem, size = 0x4, offset = 0x4, fixed_abs, tag = 'smem constant byte address 0x4 - core index']
  #allocation1 [shape = 'u32[144,128]{1,0:T(1,128)}', space=vmem, size = 0x12000, scoped, tag = 'internal scratch']
  %s0 = inlined_call_operand.hbm [shape: bf16[512,256], index: 0, kind: input, shape index: {}]
  %s1 = inlined_call_operand.hbm [shape: bf16[256,128], index: 1, kind: input, shape index: {}]
  %s2 = inlined_call_operand.hbm [shape: bf16[512,128], index: 2, kind: output, shape index: {0}]
  %s3 = inlined_call_operand.hbm [shape: f32[1,8,128], index: 3, kind: output, shape index: {1}]
  %4 = xla_tuple %s2, %s3
  %s5 = sld [smem:[#allocation0]]
  $region34: #{tpu_custom_call.1} parent=0
    _
  %s7 = ssub.s32 1, %s5
  %s8 = scalar_select 0, %s7, %s5
  $region1: #{tpu_custom_call.1} parent=0
    #allocation2 [shape = 'u8[262144]{0}', space=vmem, size = 0x40000, scoped, tag = 'input window, operand 0, single buffered']
    #allocation3 [shape = 's32[1]{0}', space=sflag, size = 0x4, scoped, tag = 'scoped memory for tpu_custom_call.1']
    #allocation4 [shape = 's32[1]{0}', space=sflag, size = 0x4, scoped, tag = 'scoped memory for tpu_custom_call.1']
    #allocation5 [shape = 'u8[65536]{0}', space=vmem, size = 0x10000, scoped, tag = 'input window, operand 1, single buffered']
    #allocation6 [shape = 's32[1]{0}', space=sflag, size = 0x4, scoped, tag = 'scoped memory for tpu_custom_call.1']
    #allocation7 [shape = 'u8[131072]{0}', space=vmem, size = 0x20000, scoped, tag = 'output window, operand 0, single buffered']
    #allocation8 [shape = 'u8[4096]{0}', space=vmem, size = 0x1000, scoped, tag = 'output window, operand 1, single buffered']
    #allocation9 [shape = 's32[1]{0}', space=sflag, size = 0x4, scoped, tag = 'scoped memory for tpu_custom_call.1']
    %9 = vsyncpa [#allocation3], 0
    %10 = vsyncpa [#allocation6], 0
    %11 = vsyncpa [#allocation4], 0
    %12 = vsyncpa [#allocation9], 0
    // Predicated region
    $region2: #{tpu_custom_call.1} parent=1 // pred_check
      _
    $region3: #{tpu_custom_call.1} parent=1 // pred_check_branch
      %14 = sbr.rel (0) target = $region5
    $region4: #{tpu_custom_call.1} parent=1 // pred_region
      %s16 = ssub.s32 8192, 8192
      %17 = vsyncadd [#allocation3], %s16
      %s18 = sshll.u32 [#allocation2], 4
      %s19 = int_to_ptr.vmem [resolvable:$true] %s18
      %24 = dma.hbm_to_vmem [thread:$0]  %s0, 8192, %s19, [#allocation3], 128, 128, 8
    $region5: #{tpu_custom_call.1} parent=1 // pred_fallthru
      _
    // Predicated region
    $region6: #{tpu_custom_call.1} parent=1 // pred_check
      _
    $region7: #{tpu_custom_call.1} parent=1 // pred_check_branch
      %26 = sbr.rel (0) target = $region9
    $region8: #{tpu_custom_call.1} parent=1 // pred_region
      %s28 = ssub.s32 2048, 2048
      %29 = vsyncadd [#allocation6], %s28
      %s30 = sshll.u32 [#allocation5], 4
      %s31 = int_to_ptr.vmem [resolvable:$true] %s30
      %36 = dma.hbm_to_vmem [thread:$0]  %s1, 2048, %s31, [#allocation6], 64, 64, 4
    $region9: #{tpu_custom_call.1} parent=1 // pred_fallthru
      _
    // Predicated region
    $region10: #{tpu_custom_call.1} parent=1 // pred_check
      _
    $region11: #{tpu_custom_call.1} parent=1 // pred_check_branch
      %38 = sbr.rel (0) target = $region13
    $region12: #{tpu_custom_call.1} parent=1 // pred_region
      %39 = dma.done [#allocation3], 8192
    $region13: #{tpu_custom_call.1} parent=1 // pred_fallthru
      _
    // Predicated region
    $region14: #{tpu_custom_call.1} parent=1 // pred_check
      _
    $region15: #{tpu_custom_call.1} parent=1 // pred_check_branch
      %41 = sbr.rel (0) target = $region17
    $region16: #{tpu_custom_call.1} parent=1 // pred_region
      %42 = dma.done [#allocation6], 2048
    $region17: #{tpu_custom_call.1} parent=1 // pred_fallthru
      _
    %v44 = vld [vmem:[#allocation2] sm:$0xff]
    %v45 = vld [vmem:[#allocation2 + $0x8] sm:$0xff]
    %v46 = vld [vmem:[#allocation2 + $0x10] sm:$0xff]
    %v47 = vld [vmem:[#allocation2 + $0x18] sm:$0xff]
    %v48 = vld [vmem:[#allocation2 + $0x20] sm:$0xff]
    %v49 = vld [vmem:[#allocation2 + $0x28] sm:$0xff]
    %v50 = vld [vmem:[#allocation2 + $0x30] sm:$0xff]
    %v51 = vld [vmem:[#allocation2 + $0x38] sm:$0xff]
    %v52 = vld [vmem:[#allocation2 + $0x40] sm:$0xff]
    %v53 = vld [vmem:[#allocation2 + $0x48] sm:$0xff]
    %v54 = vld [vmem:[#allocation2 + $0x50] sm:$0xff]
    %v55 = vld [vmem:[#allocation2 + $0x58] sm:$0xff]
    %v56 = vld [vmem:[#allocation2 + $0x60] sm:$0xff]
    %v57 = vld [vmem:[#allocation2 + $0x68] sm:$0xff]
    %v58 = vld [vmem:[#allocation2 + $0x70] sm:$0xff]
    %v59 = vld [vmem:[#allocation2 + $0x78] sm:$0xff]
    %v60 = vld [vmem:[#allocation2 + $0x80] sm:$0xff]
    %v61 = vld [vmem:[#allocation2 + $0x88] sm:$0xff]
    %v62 = vld [vmem:[#allocation2 + $0x90] sm:$0xff]
    %v63 = vld [vmem:[#allocation2 + $0x98] sm:$0xff]
    %v64 = vld [vmem:[#allocation2 + $0xa0] sm:$0xff]
    %v65 = vld [vmem:[#allocation2 + $0xa8] sm:$0xff]
    %v66 = vld [vmem:[#allocation2 + $0xb0] sm:$0xff]
    %v67 = vld [vmem:[#allocation2 + $0xb8] sm:$0xff]
    %v68 = vld [vmem:[#allocation2 + $0xc0] sm:$0xff]
    %v69 = vld [vmem:[#allocation2 + $0xc8] sm:$0xff]
    %v70 = vld [vmem:[#allocation2 + $0xd0] sm:$0xff]
    %v71 = vld [vmem:[#allocation2 + $0xd8] sm:$0xff]
    %v72 = vld [vmem:[#allocation2 + $0xe0] sm:$0xff]
    %v73 = vld [vmem:[#allocation2 + $0xe8] sm:$0xff]
    %v74 = vld [vmem:[#allocation2 + $0xf0] sm:$0xff]
    %v75 = vld [vmem:[#allocation2 + $0xf8] sm:$0xff]
    %v76 = vld [vmem:[#allocation2 + $0x100] sm:$0xff]
    %v77 = vld [vmem:[#allocation2 + $0x108] sm:$0xff]
    %v78 = vld [vmem:[#allocation2 + $0x110] sm:$0xff]
    %v79 = vld [vmem:[#allocation2 + $0x118] sm:$0xff]
    %v80 = vld [vmem:[#allocation2 + $0x120] sm:$0xff]
    %v81 = vld [vmem:[#allocation2 + $0x128] sm:$0xff]
    %v82 = vld [vmem:[#allocation2 + $0x130] sm:$0xff]
    %v83 = vld [vmem:[#allocation2 + $0x138] sm:$0xff]
    %v84 = vld [vmem:[#allocation2 + $0x140] sm:$0xff]
    %v85 = vld [vmem:[#allocation2 + $0x148] sm:$0xff]
    %v86 = vld [vmem:[#allocation2 + $0x150] sm:$0xff]
    %v87 = vld [vmem:[#allocation2 + $0x158] sm:$0xff]
    %v88 = vld [vmem:[#allocation2 + $0x160] sm:$0xff]
    %v89 = vld [vmem:[#allocation2 + $0x168] sm:$0xff]
    %v90 = vld [vmem:[#allocation2 + $0x170] sm:$0xff]
    %v91 = vld [vmem:[#allocation2 + $0x178] sm:$0xff]
    %v92 = vld [vmem:[#allocation2 + $0x180] sm:$0xff]
    %v93 = vld [vmem:[#allocation2 + $0x188] sm:$0xff]
    %v94 = vld [vmem:[#allocation2 + $0x190] sm:$0xff]
    %v95 = vld [vmem:[#allocation2 + $0x198] sm:$0xff]
    %v96 = vld [vmem:[#allocation2 + $0x1a0] sm:$0xff]
    %v97 = vld [vmem:[#allocation2 + $0x1a8] sm:$0xff]
    %v98 = vld [vmem:[#allocation2 + $0x1b0] sm:$0xff]
    %v99 = vld [vmem:[#allocation2 + $0x1b8] sm:$0xff]
    %v100 = vld [vmem:[#allocation2 + $0x1c0] sm:$0xff]
    %v101 = vld [vmem:[#allocation2 + $0x1c8] sm:$0xff]
    %v102 = vld [vmem:[#allocation2 + $0x1d0] sm:$0xff]
    %v103 = vld [vmem:[#allocation2 + $0x1d8] sm:$0xff]
    %v104 = vld [vmem:[#allocation2 + $0x1e0] sm:$0xff]
    %v105 = vld [vmem:[#allocation2 + $0x1e8] sm:$0xff]
    %v106 = vld [vmem:[#allocation2 + $0x1f0] sm:$0xff]
    %v107 = vld [vmem:[#allocation2 + $0x1f8] sm:$0xff]
    %v108 = vld [vmem:[#allocation5] sm:$0xf]
    %v109 = vld [vmem:[#allocation5 + $0x4] sm:$0xf]
    %v110 = vld [vmem:[#allocation5 + $0x8] sm:$0xf]
    %v111 = vld [vmem:[#allocation5 + $0xc] sm:$0xf]
    %v112 = vld [vmem:[#allocation5 + $0x10] sm:$0xf]
    %v113 = vld [vmem:[#allocation5 + $0x14] sm:$0xf]
    %v114 = vld [vmem:[#allocation5 + $0x18] sm:$0xf]
    %v115 = vld [vmem:[#allocation5 + $0x1c] sm:$0xf]
    %v116 = vld [vmem:[#allocation5 + $0x20] sm:$0xf]
    %v117 = vld [vmem:[#allocation5 + $0x24] sm:$0xf]
    %v118 = vld [vmem:[#allocation5 + $0x28] sm:$0xf]
    %v119 = vld [vmem:[#allocation5 + $0x2c] sm:$0xf]
    %v120 = vld [vmem:[#allocation5 + $0x30] sm:$0xf]
    %v121 = vld [vmem:[#allocation5 + $0x34] sm:$0xf]
    %v122 = vld [vmem:[#allocation5 + $0x38] sm:$0xf]
    %v123 = vld [vmem:[#allocation5 + $0x3c] sm:$0xf]
    %v124 = vld [vmem:[#allocation5 + $0x40] sm:$0xf]
    %v125 = vld [vmem:[#allocation5 + $0x44] sm:$0xf]
    %v126 = vld [vmem:[#allocation5 + $0x48] sm:$0xf]
    %v127 = vld [vmem:[#allocation5 + $0x4c] sm:$0xf]
    %v128 = vld [vmem:[#allocation5 + $0x50] sm:$0xf]
    %v129 = vld [vmem:[#allocation5 + $0x54] sm:$0xf]
    %v130 = vld [vmem:[#allocation5 + $0x58] sm:$0xf]
    %v131 = vld [vmem:[#allocation5 + $0x5c] sm:$0xf]
    %v132 = vld [vmem:[#allocation5 + $0x60] sm:$0xf]
    %v133 = vld [vmem:[#allocation5 + $0x64] sm:$0xf]
    %v134 = vld [vmem:[#allocation5 + $0x68] sm:$0xf]
    %v135 = vld [vmem:[#allocation5 + $0x6c] sm:$0xf]
    %v136 = vld [vmem:[#allocation5 + $0x70] sm:$0xf]
    %v137 = vld [vmem:[#allocation5 + $0x74] sm:$0xf]
    %v138 = vld [vmem:[#allocation5 + $0x78] sm:$0xf]
    %v139 = vld [vmem:[#allocation5 + $0x7c] sm:$0xf]
    %v204 = vunpack.c.l.b16 %v44
    %v205 = vunpack.c.h.b16 %v44
    %v206 = vunpack.c.l.b16 %v45
    %v207 = vunpack.c.h.b16 %v45
    %v208 = vunpack.c.l.b16 %v46
    %v209 = vunpack.c.h.b16 %v46
    %v210 = vunpack.c.l.b16 %v47
    %v211 = vunpack.c.h.b16 %v47
    %v212 = vunpack.c.l.b16 %v48
    %v213 = vunpack.c.h.b16 %v48
    %v214 = vunpack.c.l.b16 %v49
    %v215 = vunpack.c.h.b16 %v49
    %v216 = vunpack.c.l.b16 %v50
    %v217 = vunpack.c.h.b16 %v50
    %v218 = vunpack.c.l.b16 %v51
    %v219 = vunpack.c.h.b16 %v51
    %v220 = vunpack.c.l.b16 %v52
    %v221 = vunpack.c.h.b16 %v52
    %v222 = vunpack.c.l.b16 %v53
    %v223 = vunpack.c.h.b16 %v53
    %v224 = vunpack.c.l.b16 %v54
    %v225 = vunpack.c.h.b16 %v54
    %v226 = vunpack.c.l.b16 %v55
    %v227 = vunpack.c.h.b16 %v55
    %v228 = vunpack.c.l.b16 %v56
    %v229 = vunpack.c.h.b16 %v56
    %v230 = vunpack.c.l.b16 %v57
    %v231 = vunpack.c.h.b16 %v57
    %v232 = vunpack.c.l.b16 %v58
    %v233 = vunpack.c.h.b16 %v58
    %v234 = vunpack.c.l.b16 %v59
    %v235 = vunpack.c.h.b16 %v59
    %v236 = vunpack.c.l.b16 %v60
    %v237 = vunpack.c.h.b16 %v60
    %v238 = vunpack.c.l.b16 %v61
    %v239 = vunpack.c.h.b16 %v61
    %v240 = vunpack.c.l.b16 %v62
    %v241 = vunpack.c.h.b16 %v62
    %v242 = vunpack.c.l.b16 %v63
    %v243 = vunpack.c.h.b16 %v63
    %v244 = vunpack.c.l.b16 %v64
    %v245 = vunpack.c.h.b16 %v64
    %v246 = vunpack.c.l.b16 %v65
    %v247 = vunpack.c.h.b16 %v65
    %v248 = vunpack.c.l.b16 %v66
    %v249 = vunpack.c.h.b16 %v66
    %v250 = vunpack.c.l.b16 %v67
    %v251 = vunpack.c.h.b16 %v67
    %v252 = vunpack.c.l.b16 %v68
    %v253 = vunpack.c.h.b16 %v68
    %v254 = vunpack.c.l.b16 %v69
    %v255 = vunpack.c.h.b16 %v69
    %v256 = vunpack.c.l.b16 %v70
    %v257 = vunpack.c.h.b16 %v70
    %v258 = vunpack.c.l.b16 %v71
    %v259 = vunpack.c.h.b16 %v71
    %v260 = vunpack.c.l.b16 %v72
    %v261 = vunpack.c.h.b16 %v72
    %v262 = vunpack.c.l.b16 %v73
    %v263 = vunpack.c.h.b16 %v73
    %v264 = vunpack.c.l.b16 %v74
    %v265 = vunpack.c.h.b16 %v74
    %v266 = vunpack.c.l.b16 %v75
    %v267 = vunpack.c.h.b16 %v75
    %v268 = vunpack.c.l.b16 %v76
    %v269 = vunpack.c.h.b16 %v76
    %v270 = vunpack.c.l.b16 %v77
    %v271 = vunpack.c.h.b16 %v77
    %v272 = vunpack.c.l.b16 %v78
    %v273 = vunpack.c.h.b16 %v78
    %v274 = vunpack.c.l.b16 %v79
    %v275 = vunpack.c.h.b16 %v79
    %v276 = vunpack.c.l.b16 %v80
    %v277 = vunpack.c.h.b16 %v80
    %v278 = vunpack.c.l.b16 %v81
    %v279 = vunpack.c.h.b16 %v81
    %v280 = vunpack.c.l.b16 %v82
    %v281 = vunpack.c.h.b16 %v82
    %v282 = vunpack.c.l.b16 %v83
    %v283 = vunpack.c.h.b16 %v83
    %v284 = vunpack.c.l.b16 %v84
    %v285 = vunpack.c.h.b16 %v84
    %v286 = vunpack.c.l.b16 %v85
    %v287 = vunpack.c.h.b16 %v85
    %v288 = vunpack.c.l.b16 %v86
    %v289 = vunpack.c.h.b16 %v86
    %v290 = vunpack.c.l.b16 %v87
    %v291 = vunpack.c.h.b16 %v87
    %v292 = vunpack.c.l.b16 %v88
    %v293 = vunpack.c.h.b16 %v88
    %v294 = vunpack.c.l.b16 %v89
    %v295 = vunpack.c.h.b16 %v89
    %v296 = vunpack.c.l.b16 %v90
    %v297 = vunpack.c.h.b16 %v90
    %v298 = vunpack.c.l.b16 %v91
    %v299 = vunpack.c.h.b16 %v91
    %v300 = vunpack.c.l.b16 %v92
    %v301 = vunpack.c.h.b16 %v92
    %v302 = vunpack.c.l.b16 %v93
    %v303 = vunpack.c.h.b16 %v93
    %v304 = vunpack.c.l.b16 %v94
    %v305 = vunpack.c.h.b16 %v94
    %v306 = vunpack.c.l.b16 %v95
    %v307 = vunpack.c.h.b16 %v95
    %v308 = vunpack.c.l.b16 %v96
    %v309 = vunpack.c.h.b16 %v96
    %v310 = vunpack.c.l.b16 %v97
    %v311 = vunpack.c.h.b16 %v97
    %v312 = vunpack.c.l.b16 %v98
    %v313 = vunpack.c.h.b16 %v98
    %v314 = vunpack.c.l.b16 %v99
    %v315 = vunpack.c.h.b16 %v99
    %v316 = vunpack.c.l.b16 %v100
    %v317 = vunpack.c.h.b16 %v100
    %v318 = vunpack.c.l.b16 %v101
    %v319 = vunpack.c.h.b16 %v101
    %v320 = vunpack.c.l.b16 %v102
    %v321 = vunpack.c.h.b16 %v102
    %v322 = vunpack.c.l.b16 %v103
    %v323 = vunpack.c.h.b16 %v103
    %v324 = vunpack.c.l.b16 %v104
    %v325 = vunpack.c.h.b16 %v104
    %v326 = vunpack.c.l.b16 %v105
    %v327 = vunpack.c.h.b16 %v105
    %v328 = vunpack.c.l.b16 %v106
    %v329 = vunpack.c.h.b16 %v106
    %v330 = vunpack.c.l.b16 %v107
    %v331 = vunpack.c.h.b16 %v107
    %v332 = vpack.c.b16 %v206, %v204
    %v333 = vpack.c.b16 %v207, %v205
    %v334 = vpack.c.b16 %v210, %v208
    %v335 = vpack.c.b16 %v211, %v209
    %v336 = vpack.c.b16 %v214, %v212
    %v337 = vpack.c.b16 %v215, %v213
    %v338 = vpack.c.b16 %v218, %v216
    %v339 = vpack.c.b16 %v219, %v217
    %v340 = vpack.c.b16 %v222, %v220
    %v341 = vpack.c.b16 %v223, %v221
    %v342 = vpack.c.b16 %v226, %v224
    %v343 = vpack.c.b16 %v227, %v225
    %v344 = vpack.c.b16 %v230, %v228
    %v345 = vpack.c.b16 %v231, %v229
    %v346 = vpack.c.b16 %v234, %v232
    %v347 = vpack.c.b16 %v235, %v233
    %v348 = vpack.c.b16 %v238, %v236
    %v349 = vpack.c.b16 %v239, %v237
    %v350 = vpack.c.b16 %v242, %v240
    %v351 = vpack.c.b16 %v243, %v241
    %v352 = vpack.c.b16 %v246, %v244
    %v353 = vpack.c.b16 %v247, %v245
    %v354 = vpack.c.b16 %v250, %v248
    %v355 = vpack.c.b16 %v251, %v249
    %v356 = vpack.c.b16 %v254, %v252
    %v357 = vpack.c.b16 %v255, %v253
    %v358 = vpack.c.b16 %v258, %v256
    %v359 = vpack.c.b16 %v259, %v257
    %v360 = vpack.c.b16 %v262, %v260
    %v361 = vpack.c.b16 %v263, %v261
    %v362 = vpack.c.b16 %v266, %v264
    %v363 = vpack.c.b16 %v267, %v265
    %v364 = vpack.c.b16 %v270, %v268
    %v365 = vpack.c.b16 %v271, %v269
    %v366 = vpack.c.b16 %v274, %v272
    %v367 = vpack.c.b16 %v275, %v273
    %v368 = vpack.c.b16 %v278, %v276
    %v369 = vpack.c.b16 %v279, %v277
    %v370 = vpack.c.b16 %v282, %v280
    %v371 = vpack.c.b16 %v283, %v281
    %v372 = vpack.c.b16 %v286, %v284
    %v373 = vpack.c.b16 %v287, %v285
    %v374 = vpack.c.b16 %v290, %v288
    %v375 = vpack.c.b16 %v291, %v289
    %v376 = vpack.c.b16 %v294, %v292
    %v377 = vpack.c.b16 %v295, %v293
    %v378 = vpack.c.b16 %v298, %v296
    %v379 = vpack.c.b16 %v299, %v297
    %v380 = vpack.c.b16 %v302, %v300
    %v381 = vpack.c.b16 %v303, %v301
    %v382 = vpack.c.b16 %v306, %v304
    %v383 = vpack.c.b16 %v307, %v305
    %v384 = vpack.c.b16 %v310, %v308
    %v385 = vpack.c.b16 %v311, %v309
    %v386 = vpack.c.b16 %v314, %v312
    %v387 = vpack.c.b16 %v315, %v313
    %v388 = vpack.c.b16 %v318, %v316
    %v389 = vpack.c.b16 %v319, %v317
    %v390 = vpack.c.b16 %v322, %v320
    %v391 = vpack.c.b16 %v323, %v321
    %v392 = vpack.c.b16 %v326, %v324
    %v393 = vpack.c.b16 %v327, %v325
    %v394 = vpack.c.b16 %v330, %v328
    %v395 = vpack.c.b16 %v331, %v329
    %v492 = vunpack.c.l.b16 %v108
    %v493 = vunpack.c.l.b16 %v109
    %v494 = vunpack.c.l.b16 %v110
    %v495 = vunpack.c.l.b16 %v111
    %v496 = vunpack.c.l.b16 %v112
    %v497 = vunpack.c.l.b16 %v113
    %v498 = vunpack.c.l.b16 %v114
    %v499 = vunpack.c.l.b16 %v115
    %v500 = vunpack.c.l.b16 %v116
    %v501 = vunpack.c.l.b16 %v117
    %v502 = vunpack.c.l.b16 %v118
    %v503 = vunpack.c.l.b16 %v119
    %v504 = vunpack.c.l.b16 %v120
    %v505 = vunpack.c.l.b16 %v121
    %v506 = vunpack.c.l.b16 %v122
    %v507 = vunpack.c.l.b16 %v123
    %v508 = vunpack.c.l.b16 %v124
    %v509 = vunpack.c.l.b16 %v125
    %v510 = vunpack.c.l.b16 %v126
    %v511 = vunpack.c.l.b16 %v127
    %v512 = vunpack.c.l.b16 %v128
    %v513 = vunpack.c.l.b16 %v129
    %v514 = vunpack.c.l.b16 %v130
    %v515 = vunpack.c.l.b16 %v131
    %v516 = vunpack.c.l.b16 %v132
    %v517 = vunpack.c.l.b16 %v133
    %v518 = vunpack.c.l.b16 %v134
    %v519 = vunpack.c.l.b16 %v135
    %v520 = vunpack.c.l.b16 %v136
    %v521 = vunpack.c.l.b16 %v137
    %v522 = vunpack.c.l.b16 %v138
    %v523 = vunpack.c.l.b16 %v139
    %v524 = vpack.c.b16 %v493, %v492
    %v525 = vpack.c.b16 %v495, %v494
    %v526 = vpack.c.b16 %v497, %v496
    %v527 = vpack.c.b16 %v499, %v498
    %v528 = vpack.c.b16 %v501, %v500
    %v529 = vpack.c.b16 %v503, %v502
    %v530 = vpack.c.b16 %v505, %v504
    %v531 = vpack.c.b16 %v507, %v506
    %v532 = vpack.c.b16 %v509, %v508
    %v533 = vpack.c.b16 %v511, %v510
    %v534 = vpack.c.b16 %v513, %v512
    %v535 = vpack.c.b16 %v515, %v514
    %v536 = vpack.c.b16 %v517, %v516
    %v537 = vpack.c.b16 %v519, %v518
    %v538 = vpack.c.b16 %v521, %v520
    %v539 = vpack.c.b16 %v523, %v522
    %556 = vmatprep.subr.bf16.mxu0 0
    %557 = vmatpush1.bf16.msra.mxu0 %v524
    %558 = vmatprep.subr.bf16.mxu0 0
    %559 = vmatpush1.bf16.msra.mxu0 %v525
    %560 = vmatprep.subr.bf16.mxu0 0
    %561 = vmatpush1.bf16.msra.mxu0 %v526
    %562 = vmatprep.subr.bf16.mxu0 0
    %563 = vmatpush1.bf16.msra.mxu0 %v527
    %564 = vmatprep.subr.bf16.mxu0 0
    %565 = vmatpush1.bf16.msra.mxu0 %v528
    %566 = vmatprep.subr.bf16.mxu0 0
    %567 = vmatpush1.bf16.msra.mxu0 %v529
    %568 = vmatprep.subr.bf16.mxu0 0
    %569 = vmatpush1.bf16.msra.mxu0 %v530
    %570 = vmatprep.subr.bf16.mxu0 0
    %571 = vmatpush1.bf16.msra.mxu0 %v531
    %572 = vmatprep.subr.bf16.mxu0 0
    %573 = vmatpush1.bf16.msra.mxu0 %v532
    %574 = vmatprep.subr.bf16.mxu0 0
    %575 = vmatpush1.bf16.msra.mxu0 %v533
    %576 = vmatprep.subr.bf16.mxu0 0
    %577 = vmatpush1.bf16.msra.mxu0 %v534
    %578 = vmatprep.subr.bf16.mxu0 0
    %579 = vmatpush1.bf16.msra.mxu0 %v535
    %580 = vmatprep.subr.bf16.mxu0 0
    %581 = vmatpush1.bf16.msra.mxu0 %v536
    %582 = vmatprep.subr.bf16.mxu0 0
    %583 = vmatpush1.bf16.msra.mxu0 %v537
    %584 = vmatprep.subr.bf16.mxu0 0
    %585 = vmatpush1.bf16.msra.mxu0 %v538
    %586 = vmatprep.subr.bf16.mxu0 0
    %587 = vmatpush1.bf16.msra.mxu0 %v539
    %588 = vmatprep.mubr.bf16.mxu0 %v333
    %589 = vmatmul.mubr.bf16.gmra.mrb[0].mxu0 %v332
    %v590 = vpop.f32.mrb[0].mxu0
    %v591 = vadd.f32 0.0, %v590
    %v592 = vpop.f32.mrb[0].mxu0
    %v593 = vpop.f32.mrb[0].mxu0
    %v594 = vadd.f32 0.0, %v593
    %v595 = vpop.f32.mrb[0].mxu0
    %596 = vmatprep.mubr.bf16.mxu0 %v335
    %597 = vmatmul.mubr.bf16.gmra.mrb[0].mxu0 %v334
    %v598 = vpop.f32.mrb[0].mxu0
    %v599 = vadd.f32 0.0, %v598
    %v600 = vpop.f32.mrb[0].mxu0
    %v601 = vpop.f32.mrb[0].mxu0
    %v602 = vadd.f32 0.0, %v601
    %v603 = vpop.f32.mrb[0].mxu0
    %604 = vmatprep.mubr.bf16.mxu0 %v337
    %605 = vmatmul.mubr.bf16.gmra.mrb[0].mxu0 %v336
    %v606 = vpop.f32.mrb[0].mxu0
    %v607 = vadd.f32 0.0, %v606
    %v608 = vpop.f32.mrb[0].mxu0
    %v609 = vpop.f32.mrb[0].mxu0
    %v610 = vadd.f32 0.0, %v609
    %v611 = vpop.f32.mrb[0].mxu0
    %612 = vmatprep.mubr.bf16.mxu0 %v339
    %613 = vmatmul.mubr.bf16.gmra.mrb[0].mxu0 %v338
    %v614 = vpop.f32.mrb[0].mxu0
    %v615 = vadd.f32 0.0, %v614
    %v616 = vpop.f32.mrb[0].mxu0
    %v617 = vpop.f32.mrb[0].mxu0
    %v618 = vadd.f32 0.0, %v617
    %v619 = vpop.f32.mrb[0].mxu0
    %620 = vmatprep.mubr.bf16.mxu0 %v341
    %621 = vmatmul.mubr.bf16.gmra.mrb[0].mxu0 %v340
    %v622 = vpop.f32.mrb[0].mxu0
    %v623 = vadd.f32 0.0, %v622
    %v624 = vpop.f32.mrb[0].mxu0
    %v625 = vpop.f32.mrb[0].mxu0
    %v626 = vadd.f32 0.0, %v625
    %v627 = vpop.f32.mrb[0].mxu0
    %628 = vmatprep.mubr.bf16.mxu0 %v343
    %629 = vmatmul.mubr.bf16.gmra.mrb[0].mxu0 %v342
    %v630 = vpop.f32.mrb[0].mxu0
    %v631 = vadd.f32 0.0, %v630
    %v632 = vpop.f32.mrb[0].mxu0
    %v633 = vpop.f32.mrb[0].mxu0
    %v634 = vadd.f32 0.0, %v633
    %v635 = vpop.f32.mrb[0].mxu0
    %636 = vmatprep.mubr.bf16.mxu0 %v345
    %637 = vmatmul.mubr.bf16.gmra.mrb[0].mxu0 %v344
    %v638 = vpop.f32.mrb[0].mxu0
    %v639 = vadd.f32 0.0, %v638
    %v640 = vpop.f32.mrb[0].mxu0
    %v641 = vpop.f32.mrb[0].mxu0
    %v642 = vadd.f32 0.0, %v641
    %v643 = vpop.f32.mrb[0].mxu0
    %644 = vmatprep.mubr.bf16.mxu0 %v347
    %645 = vmatmul.mubr.bf16.gmra.mrb[0].mxu0 %v346
    %v646 = vpop.f32.mrb[0].mxu0
    %v647 = vadd.f32 0.0, %v646
    %v648 = vpop.f32.mrb[0].mxu0
    %v649 = vpop.f32.mrb[0].mxu0
    %v650 = vadd.f32 0.0, %v649
    %v651 = vpop.f32.mrb[0].mxu0
    %652 = vmatprep.mubr.bf16.mxu0 %v349
    %653 = vmatmul.mubr.bf16.gmra.mrb[0].mxu0 %v348
    %v654 = vpop.f32.mrb[0].mxu0
    %v655 = vadd.f32 0.0, %v654
    %v656 = vpop.f32.mrb[0].mxu0
    %v657 = vpop.f32.mrb[0].mxu0
    %v658 = vadd.f32 0.0, %v657
    %v659 = vpop.f32.mrb[0].mxu0
    %660 = vmatprep.mubr.bf16.mxu0 %v351
    %661 = vmatmul.mubr.bf16.gmra.mrb[0].mxu0 %v350
    %v662 = vpop.f32.mrb[0].mxu0
    %v663 = vadd.f32 0.0, %v662
    %v664 = vpop.f32.mrb[0].mxu0
    %v665 = vpop.f32.mrb[0].mxu0
    %v666 = vadd.f32 0.0, %v665
    %v667 = vpop.f32.mrb[0].mxu0
    %668 = vmatprep.mubr.bf16.mxu0 %v353
    %669 = vmatmul.mubr.bf16.gmra.mrb[0].mxu0 %v352
    %v670 = vpop.f32.mrb[0].mxu0
    %v671 = vadd.f32 0.0, %v670
    %v672 = vpop.f32.mrb[0].mxu0
    %v673 = vpop.f32.mrb[0].mxu0
    %v674 = vadd.f32 0.0, %v673
    %v675 = vpop.f32.mrb[0].mxu0
    %676 = vmatprep.mubr.bf16.mxu0 %v355
    %677 = vmatmul.mubr.bf16.gmra.mrb[0].mxu0 %v354
    %v678 = vpop.f32.mrb[0].mxu0
    %v679 = vadd.f32 0.0, %v678
    %v680 = vpop.f32.mrb[0].mxu0
    %v681 = vpop.f32.mrb[0].mxu0
    %v682 = vadd.f32 0.0, %v681
    %v683 = vpop.f32.mrb[0].mxu0
    %684 = vmatprep.mubr.bf16.mxu0 %v357
    %685 = vmatmul.mubr.bf16.gmra.mrb[0].mxu0 %v356
    %v686 = vpop.f32.mrb[0].mxu0
    %v687 = vadd.f32 0.0, %v686
    %v688 = vpop.f32.mrb[0].mxu0
    %v689 = vpop.f32.mrb[0].mxu0
    %v690 = vadd.f32 0.0, %v689
    %v691 = vpop.f32.mrb[0].mxu0
    %692 = vmatprep.mubr.bf16.mxu0 %v359
    %693 = vmatmul.mubr.bf16.gmra.mrb[0].mxu0 %v358
    %v694 = vpop.f32.mrb[0].mxu0
    %v695 = vadd.f32 0.0, %v694
    %v696 = vpop.f32.mrb[0].mxu0
    %v697 = vpop.f32.mrb[0].mxu0
    %v698 = vadd.f32 0.0, %v697
    %v699 = vpop.f32.mrb[0].mxu0
    %700 = vmatprep.mubr.bf16.mxu0 %v361
    %701 = vmatmul.mubr.bf16.gmra.mrb[0].mxu0 %v360
    %v702 = vpop.f32.mrb[0].mxu0
    %v703 = vadd.f32 0.0, %v702
    %v704 = vpop.f32.mrb[0].mxu0
    %v705 = vpop.f32.mrb[0].mxu0
    %v706 = vadd.f32 0.0, %v705
    %v707 = vpop.f32.mrb[0].mxu0
    %708 = vmatprep.mubr.bf16.mxu0 %v363
    %709 = vmatmul.mubr.bf16.gmra.mrb[0].mxu0 %v362
    %v710 = vpop.f32.mrb[0].mxu0
    %v711 = vadd.f32 0.0, %v710
    %v712 = vpop.f32.mrb[0].mxu0
    %v713 = vpop.f32.mrb[0].mxu0
    %v714 = vadd.f32 0.0, %v713
    %v715 = vpop.f32.mrb[0].mxu0
    %716 = vmatprep.mubr.bf16.mxu0 %v365
    %717 = vmatmul.mubr.bf16.gmra.mrb[0].mxu0 %v364
    %v718 = vpop.f32.mrb[0].mxu0
    %v719 = vadd.f32 0.0, %v718
    %v720 = vpop.f32.mrb[0].mxu0
    %v721 = vpop.f32.mrb[0].mxu0
    %v722 = vadd.f32 0.0, %v721
    %v723 = vpop.f32.mrb[0].mxu0
    %724 = vmatprep.mubr.bf16.mxu0 %v367
    %725 = vmatmul.mubr.bf16.gmra.mrb[0].mxu0 %v366
    %v726 = vpop.f32.mrb[0].mxu0
    %v727 = vadd.f32 0.0, %v726
    %v728 = vpop.f32.mrb[0].mxu0
    %v729 = vpop.f32.mrb[0].mxu0
    %v730 = vadd.f32 0.0, %v729
    %v731 = vpop.f32.mrb[0].mxu0
    %732 = vmatprep.mubr.bf16.mxu0 %v369
    %733 = vmatmul.mubr.bf16.gmra.mrb[0].mxu0 %v368
    %v734 = vpop.f32.mrb[0].mxu0
    %v735 = vadd.f32 0.0, %v734
    %v736 = vpop.f32.mrb[0].mxu0
    %v737 = vpop.f32.mrb[0].mxu0
    %v738 = vadd.f32 0.0, %v737
    %v739 = vpop.f32.mrb[0].mxu0
    %740 = vmatprep.mubr.bf16.mxu0 %v371
    %741 = vmatmul.mubr.bf16.gmra.mrb[0].mxu0 %v370
    %v742 = vpop.f32.mrb[0].mxu0
    %v743 = vadd.f32 0.0, %v742
    %v744 = vpop.f32.mrb[0].mxu0
    %v745 = vpop.f32.mrb[0].mxu0
    %v746 = vadd.f32 0.0, %v745
    %v747 = vpop.f32.mrb[0].mxu0
    %748 = vmatprep.mubr.bf16.mxu0 %v373
    %749 = vmatmul.mubr.bf16.gmra.mrb[0].mxu0 %v372
    %v750 = vpop.f32.mrb[0].mxu0
    %v751 = vadd.f32 0.0, %v750
    %v752 = vpop.f32.mrb[0].mxu0
    %v753 = vpop.f32.mrb[0].mxu0
    %v754 = vadd.f32 0.0, %v753
    %v755 = vpop.f32.mrb[0].mxu0
    %756 = vmatprep.mubr.bf16.mxu0 %v375
    %757 = vmatmul.mubr.bf16.gmra.mrb[0].mxu0 %v374
    %v758 = vpop.f32.mrb[0].mxu0
    %v759 = vadd.f32 0.0, %v758
    %v760 = vpop.f32.mrb[0].mxu0
    %v761 = vpop.f32.mrb[0].mxu0
    %v762 = vadd.f32 0.0, %v761
    %v763 = vpop.f32.mrb[0].mxu0
    %764 = vmatprep.mubr.bf16.mxu0 %v377
    %765 = vmatmul.mubr.bf16.gmra.mrb[0].mxu0 %v376
    %v766 = vpop.f32.mrb[0].mxu0
    %v767 = vadd.f32 0.0, %v766
    %v768 = vpop.f32.mrb[0].mxu0
    %v769 = vpop.f32.mrb[0].mxu0
    %v770 = vadd.f32 0.0, %v769
    %v771 = vpop.f32.mrb[0].mxu0
    %772 = vmatprep.mubr.bf16.mxu0 %v379
    %773 = vmatmul.mubr.bf16.gmra.mrb[0].mxu0 %v378
    %v774 = vpop.f32.mrb[0].mxu0
    %v775 = vadd.f32 0.0, %v774
    %v776 = vpop.f32.mrb[0].mxu0
    %v777 = vpop.f32.mrb[0].mxu0
    %v778 = vadd.f32 0.0, %v777
    %v779 = vpop.f32.mrb[0].mxu0
    %780 = vmatprep.mubr.bf16.mxu0 %v381
    %781 = vmatmul.mubr.bf16.gmra.mrb[0].mxu0 %v380
    %v782 = vpop.f32.mrb[0].mxu0
    %v783 = vadd.f32 0.0, %v782
    %v784 = vpop.f32.mrb[0].mxu0
    %v785 = vpop.f32.mrb[0].mxu0
    %v786 = vadd.f32 0.0, %v785
    %v787 = vpop.f32.mrb[0].mxu0
    %788 = vmatprep.mubr.bf16.mxu0 %v383
    %789 = vmatmul.mubr.bf16.gmra.mrb[0].mxu0 %v382
    %v790 = vpop.f32.mrb[0].mxu0
    %v791 = vadd.f32 0.0, %v790
    %v792 = vpop.f32.mrb[0].mxu0
    %v793 = vpop.f32.mrb[0].mxu0
    %v794 = vadd.f32 0.0, %v793
    %v795 = vpop.f32.mrb[0].mxu0
    %796 = vmatprep.mubr.bf16.mxu0 %v385
    %797 = vmatmul.mubr.bf16.gmra.mrb[0].mxu0 %v384
    %v798 = vpop.f32.mrb[0].mxu0
    %v799 = vadd.f32 0.0, %v798
    %v800 = vpop.f32.mrb[0].mxu0
    %v801 = vpop.f32.mrb[0].mxu0
    %v802 = vadd.f32 0.0, %v801
    %v803 = vpop.f32.mrb[0].mxu0
    %804 = vmatprep.mubr.bf16.mxu0 %v387
    %805 = vmatmul.mubr.bf16.gmra.mrb[0].mxu0 %v386
    %v806 = vpop.f32.mrb[0].mxu0
    %v807 = vadd.f32 0.0, %v806
    %v808 = vpop.f32.mrb[0].mxu0
    %v809 = vpop.f32.mrb[0].mxu0
    %v810 = vadd.f32 0.0, %v809
    %v811 = vpop.f32.mrb[0].mxu0
    %812 = vmatprep.mubr.bf16.mxu0 %v389
    %813 = vmatmul.mubr.bf16.gmra.mrb[0].mxu0 %v388
    %v814 = vpop.f32.mrb[0].mxu0
    %v815 = vadd.f32 0.0, %v814
    %v816 = vpop.f32.mrb[0].mxu0
    %v817 = vpop.f32.mrb[0].mxu0
    %v818 = vadd.f32 0.0, %v817
    %v819 = vpop.f32.mrb[0].mxu0
    %820 = vmatprep.mubr.bf16.mxu0 %v391
    %821 = vmatmul.mubr.bf16.gmra.mrb[0].mxu0 %v390
    %v822 = vpop.f32.mrb[0].mxu0
    %v823 = vadd.f32 0.0, %v822
    %v824 = vpop.f32.mrb[0].mxu0
    %v825 = vpop.f32.mrb[0].mxu0
    %v826 = vadd.f32 0.0, %v825
    %v827 = vpop.f32.mrb[0].mxu0
    %828 = vmatprep.mubr.bf16.mxu0 %v393
    %829 = vmatmul.mubr.bf16.gmra.mrb[0].mxu0 %v392
    %v830 = vpop.f32.mrb[0].mxu0
    %v831 = vadd.f32 0.0, %v830
    %v832 = vpop.f32.mrb[0].mxu0
    %v833 = vpop.f32.mrb[0].mxu0
    %v834 = vadd.f32 0.0, %v833
    %v835 = vpop.f32.mrb[0].mxu0
    %836 = vmatprep.mubr.bf16.mxu0 %v395
    %837 = vmatmul.mubr.bf16.gmra.mrb[0].mxu0 %v394
    %v838 = vpop.f32.mrb[0].mxu0
    %v839 = vadd.f32 0.0, %v838
    %v840 = vpop.f32.mrb[0].mxu0
    %v841 = vpop.f32.mrb[0].mxu0
    %v842 = vadd.f32 0.0, %v841
    %v843 = vpop.f32.mrb[0].mxu0
    %844 = vdwg.mxu0
    %v845 = vpack.c.bf16 %v594, %v591
    %v846 = vpack.c.bf16 %v602, %v599
    %v847 = vpack.c.bf16 %v610, %v607
    %v848 = vpack.c.bf16 %v618, %v615
    %v849 = vpack.c.bf16 %v626, %v623
    %v850 = vpack.c.bf16 %v634, %v631
    %v851 = vpack.c.bf16 %v642, %v639
    %v852 = vpack.c.bf16 %v650, %v647
    %v853 = vpack.c.bf16 %v658, %v655
    %v854 = vpack.c.bf16 %v666, %v663
    %v855 = vpack.c.bf16 %v674, %v671
    %v856 = vpack.c.bf16 %v682, %v679
    %v857 = vpack.c.bf16 %v690, %v687
    %v858 = vpack.c.bf16 %v698, %v695
    %v859 = vpack.c.bf16 %v706, %v703
    %v860 = vpack.c.bf16 %v714, %v711
    %v861 = vpack.c.bf16 %v722, %v719
    %v862 = vpack.c.bf16 %v730, %v727
    %v863 = vpack.c.bf16 %v738, %v735
    %v864 = vpack.c.bf16 %v746, %v743
    %v865 = vpack.c.bf16 %v754, %v751
    %v866 = vpack.c.bf16 %v762, %v759
    %v867 = vpack.c.bf16 %v770, %v767
    %v868 = vpack.c.bf16 %v778, %v775
    %v869 = vpack.c.bf16 %v786, %v783
    %v870 = vpack.c.bf16 %v794, %v791
    %v871 = vpack.c.bf16 %v802, %v799
    %v872 = vpack.c.bf16 %v810, %v807
    %v873 = vpack.c.bf16 %v818, %v815
    %v874 = vpack.c.bf16 %v826, %v823
    %v875 = vpack.c.bf16 %v834, %v831
    %v876 = vpack.c.bf16 %v842, %v839
    %v909 = vunpack.c.l.b16 %v845
    %v910 = vunpack.c.h.b16 %v845
    %v911 = vunpack.c.l.b16 %v846
    %v912 = vunpack.c.h.b16 %v846
    %v913 = vunpack.c.l.b16 %v847
    %v914 = vunpack.c.h.b16 %v847
    %v915 = vunpack.c.l.b16 %v848
    %v916 = vunpack.c.h.b16 %v848
    %v917 = vunpack.c.l.b16 %v849
    %v918 = vunpack.c.h.b16 %v849
    %v919 = vunpack.c.l.b16 %v850
    %v920 = vunpack.c.h.b16 %v850
    %v921 = vunpack.c.l.b16 %v851
    %v922 = vunpack.c.h.b16 %v851
    %v923 = vunpack.c.l.b16 %v852
    %v924 = vunpack.c.h.b16 %v852
    %v925 = vunpack.c.l.b16 %v853
    %v926 = vunpack.c.h.b16 %v853
    %v927 = vunpack.c.l.b16 %v854
    %v928 = vunpack.c.h.b16 %v854
    %v929 = vunpack.c.l.b16 %v855
    %v930 = vunpack.c.h.b16 %v855
    %v931 = vunpack.c.l.b16 %v856
    %v932 = vunpack.c.h.b16 %v856
    %v933 = vunpack.c.l.b16 %v857
    %v934 = vunpack.c.h.b16 %v857
    %v935 = vunpack.c.l.b16 %v858
    %v936 = vunpack.c.h.b16 %v858
    %v937 = vunpack.c.l.b16 %v859
    %v938 = vunpack.c.h.b16 %v859
    %v939 = vunpack.c.l.b16 %v860
    %v940 = vunpack.c.h.b16 %v860
    %v941 = vunpack.c.l.b16 %v861
    %v942 = vunpack.c.h.b16 %v861
    %v943 = vunpack.c.l.b16 %v862
    %v944 = vunpack.c.h.b16 %v862
    %v945 = vunpack.c.l.b16 %v863
    %v946 = vunpack.c.h.b16 %v863
    %v947 = vunpack.c.l.b16 %v864
    %v948 = vunpack.c.h.b16 %v864
    %v949 = vunpack.c.l.b16 %v865
    %v950 = vunpack.c.h.b16 %v865
    %v951 = vunpack.c.l.b16 %v866
    %v952 = vunpack.c.h.b16 %v866
    %v953 = vunpack.c.l.b16 %v867
    %v954 = vunpack.c.h.b16 %v867
    %v955 = vunpack.c.l.b16 %v868
    %v956 = vunpack.c.h.b16 %v868
    %v957 = vunpack.c.l.b16 %v869
    %v958 = vunpack.c.h.b16 %v869
    %v959 = vunpack.c.l.b16 %v870
    %v960 = vunpack.c.h.b16 %v870
    %v961 = vunpack.c.l.b16 %v871
    %v962 = vunpack.c.h.b16 %v871
    %v963 = vunpack.c.l.b16 %v872
    %v964 = vunpack.c.h.b16 %v872
    %v965 = vunpack.c.l.b16 %v873
    %v966 = vunpack.c.h.b16 %v873
    %v967 = vunpack.c.l.b16 %v874
    %v968 = vunpack.c.h.b16 %v874
    %v969 = vunpack.c.l.b16 %v875
    %v970 = vunpack.c.h.b16 %v875
    %v971 = vunpack.c.l.b16 %v876
    %v972 = vunpack.c.h.b16 %v876
    %v973 = vpack.c.b16 %v909, %v909
    %v974 = vpack.c.b16 %v910, %v910
    %v975 = vpack.c.b16 %v911, %v911
    %v976 = vpack.c.b16 %v912, %v912
    %v977 = vpack.c.b16 %v913, %v913
    %v978 = vpack.c.b16 %v914, %v914
    %v979 = vpack.c.b16 %v915, %v915
    %v980 = vpack.c.b16 %v916, %v916
    %v981 = vpack.c.b16 %v917, %v917
    %v982 = vpack.c.b16 %v918, %v918
    %v983 = vpack.c.b16 %v919, %v919
    %v984 = vpack.c.b16 %v920, %v920
    %v985 = vpack.c.b16 %v921, %v921
    %v986 = vpack.c.b16 %v922, %v922
    %v987 = vpack.c.b16 %v923, %v923
    %v988 = vpack.c.b16 %v924, %v924
    %v989 = vpack.c.b16 %v925, %v925
    %v990 = vpack.c.b16 %v926, %v926
    %v991 = vpack.c.b16 %v927, %v927
    %v992 = vpack.c.b16 %v928, %v928
    %v993 = vpack.c.b16 %v929, %v929
    %v994 = vpack.c.b16 %v930, %v930
    %v995 = vpack.c.b16 %v931, %v931
    %v996 = vpack.c.b16 %v932, %v932
    %v997 = vpack.c.b16 %v933, %v933
    %v998 = vpack.c.b16 %v934, %v934
    %v999 = vpack.c.b16 %v935, %v935
    %v1000 = vpack.c.b16 %v936, %v936
    %v1001 = vpack.c.b16 %v937, %v937
    %v1002 = vpack.c.b16 %v938, %v938
    %v1003 = vpack.c.b16 %v939, %v939
    %v1004 = vpack.c.b16 %v940, %v940
    %v1005 = vpack.c.b16 %v941, %v941
    %v1006 = vpack.c.b16 %v942, %v942
    %v1007 = vpack.c.b16 %v943, %v943
    %v1008 = vpack.c.b16 %v944, %v944
    %v1009 = vpack.c.b16 %v945, %v945
    %v1010 = vpack.c.b16 %v946, %v946
    %v1011 = vpack.c.b16 %v947, %v947
    %v1012 = vpack.c.b16 %v948, %v948
    %v1013 = vpack.c.b16 %v949, %v949
    %v1014 = vpack.c.b16 %v950, %v950
    %v1015 = vpack.c.b16 %v951, %v951
    %v1016 = vpack.c.b16 %v952, %v952
    %v1017 = vpack.c.b16 %v953, %v953
    %v1018 = vpack.c.b16 %v954, %v954
    %v1019 = vpack.c.b16 %v955, %v955
    %v1020 = vpack.c.b16 %v956, %v956
    %v1021 = vpack.c.b16 %v957, %v957
    %v1022 = vpack.c.b16 %v958, %v958
    %v1023 = vpack.c.b16 %v959, %v959
    %v1024 = vpack.c.b16 %v960, %v960
    %v1025 = vpack.c.b16 %v961, %v961
    %v1026 = vpack.c.b16 %v962, %v962
    %v1027 = vpack.c.b16 %v963, %v963
    %v1028 = vpack.c.b16 %v964, %v964
    %v1029 = vpack.c.b16 %v965, %v965
    %v1030 = vpack.c.b16 %v966, %v966
    %v1031 = vpack.c.b16 %v967, %v967
    %v1032 = vpack.c.b16 %v968, %v968
    %v1033 = vpack.c.b16 %v969, %v969
    %v1034 = vpack.c.b16 %v970, %v970
    %v1035 = vpack.c.b16 %v971, %v971
    %v1036 = vpack.c.b16 %v972, %v972
    %1101 = vst [vmem:[#allocation7] sm:$0xf] %v973
    %1102 = vst [vmem:[#allocation7 + $0x4] sm:$0xf] %v974
    %1103 = vst [vmem:[#allocation7 + $0x8] sm:$0xf] %v975
    %1104 = vst [vmem:[#allocation7 + $0xc] sm:$0xf] %v976
    %1105 = vst [vmem:[#allocation7 + $0x10] sm:$0xf] %v977
    %1106 = vst [vmem:[#allocation7 + $0x14] sm:$0xf] %v978
    %1107 = vst [vmem:[#allocation7 + $0x18] sm:$0xf] %v979
    %1108 = vst [vmem:[#allocation7 + $0x1c] sm:$0xf] %v980
    %1109 = vst [vmem:[#allocation7 + $0x20] sm:$0xf] %v981
    %1110 = vst [vmem:[#allocation7 + $0x24] sm:$0xf] %v982
    %1111 = vst [vmem:[#allocation7 + $0x28] sm:$0xf] %v983
    %1112 = vst [vmem:[#allocation7 + $0x2c] sm:$0xf] %v984
    %1113 = vst [vmem:[#allocation7 + $0x30] sm:$0xf] %v985
    %1114 = vst [vmem:[#allocation7 + $0x34] sm:$0xf] %v986
    %1115 = vst [vmem:[#allocation7 + $0x38] sm:$0xf] %v987
    %1116 = vst [vmem:[#allocation7 + $0x3c] sm:$0xf] %v988
    %1117 = vst [vmem:[#allocation7 + $0x40] sm:$0xf] %v989
    %1118 = vst [vmem:[#allocation7 + $0x44] sm:$0xf] %v990
    %1119 = vst [vmem:[#allocation7 + $0x48] sm:$0xf] %v991
    %1120 = vst [vmem:[#allocation7 + $0x4c] sm:$0xf] %v992
    %1121 = vst [vmem:[#allocation7 + $0x50] sm:$0xf] %v993
    %1122 = vst [vmem:[#allocation7 + $0x54] sm:$0xf] %v994
    %1123 = vst [vmem:[#allocation7 + $0x58] sm:$0xf] %v995
    %1124 = vst [vmem:[#allocation7 + $0x5c] sm:$0xf] %v996
    %1125 = vst [vmem:[#allocation7 + $0x60] sm:$0xf] %v997
    %1126 = vst [vmem:[#allocation7 + $0x64] sm:$0xf] %v998
    %1127 = vst [vmem:[#allocation7 + $0x68] sm:$0xf] %v999
    %1128 = vst [vmem:[#allocation7 + $0x6c] sm:$0xf] %v1000
    %1129 = vst [vmem:[#allocation7 + $0x70] sm:$0xf] %v1001
    %1130 = vst [vmem:[#allocation7 + $0x74] sm:$0xf] %v1002
    %1131 = vst [vmem:[#allocation7 + $0x78] sm:$0xf] %v1003
    %1132 = vst [vmem:[#allocation7 + $0x7c] sm:$0xf] %v1004
    %1133 = vst [vmem:[#allocation7 + $0x80] sm:$0xf] %v1005
    %1134 = vst [vmem:[#allocation7 + $0x84] sm:$0xf] %v1006
    %1135 = vst [vmem:[#allocation7 + $0x88] sm:$0xf] %v1007
    %1136 = vst [vmem:[#allocation7 + $0x8c] sm:$0xf] %v1008
    %1137 = vst [vmem:[#allocation7 + $0x90] sm:$0xf] %v1009
    %1138 = vst [vmem:[#allocation7 + $0x94] sm:$0xf] %v1010
    %1139 = vst [vmem:[#allocation7 + $0x98] sm:$0xf] %v1011
    %1140 = vst [vmem:[#allocation7 + $0x9c] sm:$0xf] %v1012
    %1141 = vst [vmem:[#allocation7 + $0xa0] sm:$0xf] %v1013
    %1142 = vst [vmem:[#allocation7 + $0xa4] sm:$0xf] %v1014
    %1143 = vst [vmem:[#allocation7 + $0xa8] sm:$0xf] %v1015
    %1144 = vst [vmem:[#allocation7 + $0xac] sm:$0xf] %v1016
    %1145 = vst [vmem:[#allocation7 + $0xb0] sm:$0xf] %v1017
    %1146 = vst [vmem:[#allocation7 + $0xb4] sm:$0xf] %v1018
    %1147 = vst [vmem:[#allocation7 + $0xb8] sm:$0xf] %v1019
    %1148 = vst [vmem:[#allocation7 + $0xbc] sm:$0xf] %v1020
    %1149 = vst [vmem:[#allocation7 + $0xc0] sm:$0xf] %v1021
    %1150 = vst [vmem:[#allocation7 + $0xc4] sm:$0xf] %v1022
    %1151 = vst [vmem:[#allocation7 + $0xc8] sm:$0xf] %v1023
    %1152 = vst [vmem:[#allocation7 + $0xcc] sm:$0xf] %v1024
    %1153 = vst [vmem:[#allocation7 + $0xd0] sm:$0xf] %v1025
    %1154 = vst [vmem:[#allocation7 + $0xd4] sm:$0xf] %v1026
    %1155 = vst [vmem:[#allocation7 + $0xd8] sm:$0xf] %v1027
    %1156 = vst [vmem:[#allocation7 + $0xdc] sm:$0xf] %v1028
    %1157 = vst [vmem:[#allocation7 + $0xe0] sm:$0xf] %v1029
    %1158 = vst [vmem:[#allocation7 + $0xe4] sm:$0xf] %v1030
    %1159 = vst [vmem:[#allocation7 + $0xe8] sm:$0xf] %v1031
    %1160 = vst [vmem:[#allocation7 + $0xec] sm:$0xf] %v1032
    %1161 = vst [vmem:[#allocation7 + $0xf0] sm:$0xf] %v1033
    %1162 = vst [vmem:[#allocation7 + $0xf4] sm:$0xf] %v1034
    %1163 = vst [vmem:[#allocation7 + $0xf8] sm:$0xf] %v1035
    %1164 = vst [vmem:[#allocation7 + $0xfc] sm:$0xf] %v1036
    %v1165 = vadd.f32 %v591, %v594
    %v1166 = vadd.f32 %v1165, %v599
    %v1167 = vadd.f32 %v1166, %v602
    %v1168 = vadd.f32 %v1167, %v607
    %v1169 = vadd.f32 %v1168, %v610
    %v1170 = vadd.f32 %v1169, %v615
    %v1171 = vadd.f32 %v1170, %v618
    %v1172 = vadd.f32 %v1171, %v623
    %v1173 = vadd.f32 %v1172, %v626
    %v1174 = vadd.f32 %v1173, %v631
    %v1175 = vadd.f32 %v1174, %v634
    %v1176 = vadd.f32 %v1175, %v639
    %v1177 = vadd.f32 %v1176, %v642
    %v1178 = vadd.f32 %v1177, %v647
    %v1179 = vadd.f32 %v1178, %v650
    %v1180 = vadd.f32 %v1179, %v655
    %v1181 = vadd.f32 %v1180, %v658
    %v1182 = vadd.f32 %v1181, %v663
    %v1183 = vadd.f32 %v1182, %v666
    %v1184 = vadd.f32 %v1183, %v671
    %v1185 = vadd.f32 %v1184, %v674
    %v1186 = vadd.f32 %v1185, %v679
    %v1187 = vadd.f32 %v1186, %v682
    %v1188 = vadd.f32 %v1187, %v687
    %v1189 = vadd.f32 %v1188, %v690
    %v1190 = vadd.f32 %v1189, %v695
    %v1191 = vadd.f32 %v1190, %v698
    %v1192 = vadd.f32 %v1191, %v703
    %v1193 = vadd.f32 %v1192, %v706
    %v1194 = vadd.f32 %v1193, %v711
    %v1195 = vadd.f32 %v1194, %v714
    %v1196 = vadd.f32 %v1195, %v719
    %v1197 = vadd.f32 %v1196, %v722
    %v1198 = vadd.f32 %v1197, %v727
    %v1199 = vadd.f32 %v1198, %v730
    %v1200 = vadd.f32 %v1199, %v735
    %v1201 = vadd.f32 %v1200, %v738
    %v1202 = vadd.f32 %v1201, %v743
    %v1203 = vadd.f32 %v1202, %v746
    %v1204 = vadd.f32 %v1203, %v751
    %v1205 = vadd.f32 %v1204, %v754
    %v1206 = vadd.f32 %v1205, %v759
    %v1207 = vadd.f32 %v1206, %v762
    %v1208 = vadd.f32 %v1207, %v767
    %v1209 = vadd.f32 %v1208, %v770
    %v1210 = vadd.f32 %v1209, %v775
    %v1211 = vadd.f32 %v1210, %v778
    %v1212 = vadd.f32 %v1211, %v783
    %v1213 = vadd.f32 %v1212, %v786
    %v1214 = vadd.f32 %v1213, %v791
    %v1215 = vadd.f32 %v1214, %v794
    %v1216 = vadd.f32 %v1215, %v799
    %v1217 = vadd.f32 %v1216, %v802
    %v1218 = vadd.f32 %v1217, %v807
    %v1219 = vadd.f32 %v1218, %v810
    %v1220 = vadd.f32 %v1219, %v815
    %v1221 = vadd.f32 %v1220, %v818
    %v1222 = vadd.f32 %v1221, %v823
    %v1223 = vadd.f32 %v1222, %v826
    %v1224 = vadd.f32 %v1223, %v831
    %v1225 = vadd.f32 %v1224, %v834
    %v1226 = vadd.f32 %v1225, %v839
    %v1227 = vadd.f32 %v1226, %v842
    %v1228 = vrot.slane %v1227, 4
    %v1229 = vadd.f32 %v1227, %v1228
    %v1230 = vrot.slane %v1229, 2
    %v1231 = vadd.f32 %v1229, %v1230
    %v1232 = vrot.slane %v1231, 1
    %v1233 = vadd.f32 %v1231, %v1232
    %v1234 = vmul.f32 %v591, %v591
    %v1235 = vmul.f32 %v594, %v594
    %v1236 = vmul.f32 %v599, %v599
    %v1237 = vmul.f32 %v602, %v602
    %v1238 = vmul.f32 %v607, %v607
    %v1239 = vmul.f32 %v610, %v610
    %v1240 = vmul.f32 %v615, %v615
    %v1241 = vmul.f32 %v618, %v618
    %v1242 = vmul.f32 %v623, %v623
    %v1243 = vmul.f32 %v626, %v626
    %v1244 = vmul.f32 %v631, %v631
    %v1245 = vmul.f32 %v634, %v634
    %v1246 = vmul.f32 %v639, %v639
    %v1247 = vmul.f32 %v642, %v642
    %v1248 = vmul.f32 %v647, %v647
    %v1249 = vmul.f32 %v650, %v650
    %v1250 = vmul.f32 %v655, %v655
    %v1251 = vmul.f32 %v658, %v658
    %v1252 = vmul.f32 %v663, %v663
    %v1253 = vmul.f32 %v666, %v666
    %v1254 = vmul.f32 %v671, %v671
    %v1255 = vmul.f32 %v674, %v674
    %v1256 = vmul.f32 %v679, %v679
    %v1257 = vmul.f32 %v682, %v682
    %v1258 = vmul.f32 %v687, %v687
    %v1259 = vmul.f32 %v690, %v690
    %v1260 = vmul.f32 %v695, %v695
    %v1261 = vmul.f32 %v698, %v698
    %v1262 = vmul.f32 %v703, %v703
    %v1263 = vmul.f32 %v706, %v706
    %v1264 = vmul.f32 %v711, %v711
    %v1265 = vmul.f32 %v714, %v714
    %v1266 = vmul.f32 %v719, %v719
    %v1267 = vmul.f32 %v722, %v722
    %v1268 = vmul.f32 %v727, %v727
    %v1269 = vmul.f32 %v730, %v730
    %v1270 = vmul.f32 %v735, %v735
    %v1271 = vmul.f32 %v738, %v738
    %v1272 = vmul.f32 %v743, %v743
    %v1273 = vmul.f32 %v746, %v746
    %v1274 = vmul.f32 %v751, %v751
    %v1275 = vmul.f32 %v754, %v754
    %v1276 = vmul.f32 %v759, %v759
    %v1277 = vmul.f32 %v762, %v762
    %v1278 = vmul.f32 %v767, %v767
    %v1279 = vmul.f32 %v770, %v770
    %v1280 = vmul.f32 %v775, %v775
    %v1281 = vmul.f32 %v778, %v778
    %v1282 = vmul.f32 %v783, %v783
    %v1283 = vmul.f32 %v786, %v786
    %v1284 = vmul.f32 %v791, %v791
    %v1285 = vmul.f32 %v794, %v794
    %v1286 = vmul.f32 %v799, %v799
    %v1287 = vmul.f32 %v802, %v802
    %v1288 = vmul.f32 %v807, %v807
    %v1289 = vmul.f32 %v810, %v810
    %v1290 = vmul.f32 %v815, %v815
    %v1291 = vmul.f32 %v818, %v818
    %v1292 = vmul.f32 %v823, %v823
    %v1293 = vmul.f32 %v826, %v826
    %v1294 = vmul.f32 %v831, %v831
    %v1295 = vmul.f32 %v834, %v834
    %v1296 = vmul.f32 %v839, %v839
    %v1297 = vmul.f32 %v842, %v842
    %v1298 = vadd.f32 %v1234, %v1235
    %v1299 = vadd.f32 %v1298, %v1236
    %v1300 = vadd.f32 %v1299, %v1237
    %v1301 = vadd.f32 %v1300, %v1238
    %v1302 = vadd.f32 %v1301, %v1239
    %v1303 = vadd.f32 %v1302, %v1240
    %v1304 = vadd.f32 %v1303, %v1241
    %v1305 = vadd.f32 %v1304, %v1242
    %v1306 = vadd.f32 %v1305, %v1243
    %v1307 = vadd.f32 %v1306, %v1244
    %v1308 = vadd.f32 %v1307, %v1245
    %v1309 = vadd.f32 %v1308, %v1246
    %v1310 = vadd.f32 %v1309, %v1247
    %v1311 = vadd.f32 %v1310, %v1248
    %v1312 = vadd.f32 %v1311, %v1249
    %v1313 = vadd.f32 %v1312, %v1250
    %v1314 = vadd.f32 %v1313, %v1251
    %v1315 = vadd.f32 %v1314, %v1252
    %v1316 = vadd.f32 %v1315, %v1253
    %v1317 = vadd.f32 %v1316, %v1254
    %v1318 = vadd.f32 %v1317, %v1255
    %v1319 = vadd.f32 %v1318, %v1256
    %v1320 = vadd.f32 %v1319, %v1257
    %v1321 = vadd.f32 %v1320, %v1258
    %v1322 = vadd.f32 %v1321, %v1259
    %v1323 = vadd.f32 %v1322, %v1260
    %v1324 = vadd.f32 %v1323, %v1261
    %v1325 = vadd.f32 %v1324, %v1262
    %v1326 = vadd.f32 %v1325, %v1263
    %v1327 = vadd.f32 %v1326, %v1264
    %v1328 = vadd.f32 %v1327, %v1265
    %v1329 = vadd.f32 %v1328, %v1266
    %v1330 = vadd.f32 %v1329, %v1267
    %v1331 = vadd.f32 %v1330, %v1268
    %v1332 = vadd.f32 %v1331, %v1269
    %v1333 = vadd.f32 %v1332, %v1270
    %v1334 = vadd.f32 %v1333, %v1271
    %v1335 = vadd.f32 %v1334, %v1272
    %v1336 = vadd.f32 %v1335, %v1273
    %v1337 = vadd.f32 %v1336, %v1274
    %v1338 = vadd.f32 %v1337, %v1275
    %v1339 = vadd.f32 %v1338, %v1276
    %v1340 = vadd.f32 %v1339, %v1277
    %v1341 = vadd.f32 %v1340, %v1278
    %v1342 = vadd.f32 %v1341, %v1279
    %v1343 = vadd.f32 %v1342, %v1280
    %v1344 = vadd.f32 %v1343, %v1281
    %v1345 = vadd.f32 %v1344, %v1282
    %v1346 = vadd.f32 %v1345, %v1283
    %v1347 = vadd.f32 %v1346, %v1284
    %v1348 = vadd.f32 %v1347, %v1285
    %v1349 = vadd.f32 %v1348, %v1286
    %v1350 = vadd.f32 %v1349, %v1287
    %v1351 = vadd.f32 %v1350, %v1288
    %v1352 = vadd.f32 %v1351, %v1289
    %v1353 = vadd.f32 %v1352, %v1290
    %v1354 = vadd.f32 %v1353, %v1291
    %v1355 = vadd.f32 %v1354, %v1292
    %v1356 = vadd.f32 %v1355, %v1293
    %v1357 = vadd.f32 %v1356, %v1294
    %v1358 = vadd.f32 %v1357, %v1295
    %v1359 = vadd.f32 %v1358, %v1296
    %v1360 = vadd.f32 %v1359, %v1297
    %v1361 = vrot.slane %v1360, 4
    %v1362 = vadd.f32 %v1360, %v1361
    %v1363 = vrot.slane %v1362, 2
    %v1364 = vadd.f32 %v1362, %v1363
    %v1365 = vrot.slane %v1364, 1
    %v1366 = vadd.f32 %v1364, %v1365
    %vm1367 = vcmask 1040384
    %v1368 = vsel %vm1367, %v1233, %v1366
    %vm1369 = vcmask 1041408
    %v1370 = vsel %vm1369, %v1368, 0.0
    %1371 = vst [vmem:[#allocation8] sm:$0xff] %v1370
    // Predicated region
    $region18: #{tpu_custom_call.1} parent=1 // pred_check
      _
    $region19: #{tpu_custom_call.1} parent=1 // pred_check_branch
      %1373 = sbr.rel (0) target = $region21
    $region20: #{tpu_custom_call.1} parent=1 // pred_region
      %s1375 = ssub.s32 4096, 4096
      %1376 = vsyncadd [#allocation4], %s1375
      %s1377 = sshll.u32 [#allocation7], 4
      %s1378 = int_to_ptr.vmem [resolvable:$true] %s1377
      %1383 = dma.vmem_to_hbm [thread:$0]  %s1378, 4096, %s2, [#allocation4], 64, 64, 4
    $region21: #{tpu_custom_call.1} parent=1 // pred_fallthru
      _
    // Predicated region
    $region22: #{tpu_custom_call.1} parent=1 // pred_check
      _
    $region23: #{tpu_custom_call.1} parent=1 // pred_check_branch
      %1385 = sbr.rel (0) target = $region25
    $region24: #{tpu_custom_call.1} parent=1 // pred_region
      %s1387 = ssub.s32 128, 128
      %1388 = vsyncadd [#allocation9], %s1387
      %s1390 = sshll.u32 [#allocation8], 4
      %s1391 = int_to_ptr.vmem [resolvable:$true] %s1390
      %1393 = dma.vmem_to_hbm [thread:$0]  %s1391, 128, %s3, [#allocation9]
    $region25: #{tpu_custom_call.1} parent=1 // pred_fallthru
      _
    // Predicated region
    $region26: #{tpu_custom_call.1} parent=1 // pred_check
      _
    $region27: #{tpu_custom_call.1} parent=1 // pred_check_branch
      %1395 = sbr.rel (0) target = $region29
    $region28: #{tpu_custom_call.1} parent=1 // pred_region
      %1396 = dma.done [#allocation4], 4096
    $region29: #{tpu_custom_call.1} parent=1 // pred_fallthru
      _
    // Predicated region
    $region30: #{tpu_custom_call.1} parent=1 // pred_check
      _
    $region31: #{tpu_custom_call.1} parent=1 // pred_check_branch
      %1398 = sbr.rel (0) target = $region33
    $region32: #{tpu_custom_call.1} parent=1 // pred_region
      %1399 = dma.done [#allocation9], 128
    $region33: #{tpu_custom_call.1} parent=1 // pred_fallthru
      _
    %1400 = vsyncpa [#allocation3], 1
    %1401 = vsyncpa [#allocation6], 1
    %1402 = vsyncpa [#allocation4], 1
    %1403 = vsyncpa [#allocation9], 1

</llo_original>
